<compile_context>
chip_gen: v6e
topology: v6e:2x2x1
jax: 0.10.0
libtpu: 0.0.40
codegen_flags: <defaults>
</compile_context>

<pallas_src>
import functools

import jax
import jax.numpy as jnp
from jax.experimental import pallas as pl
from jax.experimental.pallas import tpu as pltpu


_SQRT_2_OVER_PI = 0.7978845608028654


def _gelu_tanh(h):
    """tanh-approximate GELU in f32 (tanh lands on the EUP slot)."""
    inner = h * (1.0 + 0.044715 * h * h)   # one fewer vmul than h + c*h^3
    return 0.5 * h * (1.0 + jnp.tanh(_SQRT_2_OVER_PI * inner))


def _round_up(x, m):
    return ((x + m - 1) // m) * m


# ----------------------------------------------------------------------------
# Pallas kernels
# ----------------------------------------------------------------------------
def _cls_gather_gelu_kernel(ids_ref, ew_ref, b_ref, o_ref, *, vocab_pad, tb):
    """'cls' pooling: features = GELU(EW[ids[:,0]] + b), token 0 only.

    ids_ref: [tb, 1] int32   ew_ref: [Vp, H] bf16 (resident)
    b_ref:   [1, H]  f32     o_ref:  [tb, H] f32
    """
    ids = ids_ref[...]                                           # [tb, 1]
    iota = jax.lax.broadcasted_iota(jnp.int32, (tb, vocab_pad), 1)
    onehot = (iota == ids).astype(jnp.bfloat16)                  # [tb, Vp]
    h = jnp.dot(onehot, ew_ref[...], preferred_element_type=jnp.float32)
    o_ref[...] = _gelu_tanh(h + b_ref[...])


def _fused_gather_gelu_pool_kernel(ids_ref, ew_ref, b_ref, o_ref, *,
                                   pooling, inv_s, vocab_pad, tb, ts, hidden):
    """Fused embedding gather (one-hot MXU) + bias + GELU + mean/max pooling.

    Grid: (batch tiles, seq tiles); seq axis last + "arbitrary".
    ids_ref: [tb, ts] int32   ew_ref: [Vp, H] bf16 (resident)
    b_ref:   [1, H]   f32     o_ref:  [tb, H] f32 (resident accumulator output)
    """
    j = pl.program_id(1)

    @pl.when(j == 0)
    def _init():
        if pooling == "max":
            o_ref[...] = jnp.full_like(o_ref, -jnp.inf)
        else:
            o_ref[...] = jnp.zeros_like(o_ref)

    ids = ids_ref[...]                                           # [tb, ts]
    iota = jax.lax.broadcasted_iota(jnp.int32, (tb, ts, vocab_pad), 2)
    onehot = (iota == ids[:, :, None]).astype(jnp.bfloat16)      # [tb, ts, Vp]
    onehot2 = onehot.reshape(tb * ts, vocab_pad)                 # ts % 8 == 0 -> free
    h = jnp.dot(onehot2, ew_ref[...], preferred_element_type=jnp.float32)
    h = _gelu_tanh(h + b_ref[...])                               # f32
    h = h.reshape(tb, ts, hidden)

    if pooling == "max":
        o_ref[...] = jnp.maximum(o_ref[...], jnp.max(h, axis=1))
    else:  # 'mean' accumulates a sum, scaled by 1/S at the end.
        o_ref[...] += jnp.sum(h, axis=1)

    if pooling == "mean":
        @pl.when(j == pl.num_programs(1) - 1)
        def _finish():
            o_ref[...] *= inv_s


# ----------------------------------------------------------------------------
# Tile selection (keeps blocks legal: dims % (8, 128) == 0 or full extent)
# ----------------------------------------------------------------------------
def _pick_cls_batch_tile(batch_pad):
    """Large tb so the cls path is not pure per-step overhead."""
    if batch_pad <= 1024:
        return batch_pad
    for tb in range(1024, 7, -8):
        if batch_pad % tb == 0:
            return tb
    return 8


def _pick_seq_tile(seq, tb, vocab_pad, hidden):
    """Largest legal seq tile whose in-kernel intermediates stay ~<= 8 MiB."""
    # Per token-row: one-hot (bf16) + h / h3 (f32).
    row_bytes = vocab_pad * 2 + hidden * 8
    target_rows = max(64, min(4096, (8 << 20) // row_bytes))
    if seq % 128 != 0:
        # ids block minor dim must be a multiple of 128 or the full extent.
        return seq
    cap = max(128, ((target_rows // tb) // 128) * 128)
    best = 128
    d = 256
    while d <= min(seq, cap):
        if seq % d == 0:
            best = d
        d += 128
    return best


def _pad_batch(x, multiple):
    pad = (-x.shape[0]) % multiple
    if pad:
        x = jnp.concatenate(
            [x, jnp.zeros((pad,) + x.shape[1:], x.dtype)], axis=0)
    return x


# ----------------------------------------------------------------------------
# pallas_call wrappers
# ----------------------------------------------------------------------------
def _encode_cls(ids0, ew_bf16, b_f32):
    """ids0: [B_pad, 1] int32 -> features [B_pad, H] f32."""
    batch_pad, _ = ids0.shape
    vocab_pad, hidden = ew_bf16.shape
    tb = _pick_cls_batch_tile(batch_pad)
    kern = functools.partial(_cls_gather_gelu_kernel, vocab_pad=vocab_pad, tb=tb)
    return pl.pallas_call(
        kern,
        out_shape=jax.ShapeDtypeStruct((batch_pad, hidden), jnp.float32),
        grid=(batch_pad // tb,),
        in_specs=[
            pl.BlockSpec((tb, 1), lambda i: (i, 0)),
            pl.BlockSpec((vocab_pad, hidden), lambda i: (0, 0)),   # EW resident
            pl.BlockSpec((1, hidden), lambda i: (0, 0)),
        ],
        out_specs=pl.BlockSpec((tb, hidden), lambda i: (i, 0)),
        compiler_params=pltpu.CompilerParams(
            dimension_semantics=("parallel",),
            vmem_limit_bytes=32 * 1024 * 1024),
    )(ids0, ew_bf16, b_f32)


def _encode_and_pool(ids, ew_bf16, b_f32, pooling):
    """ids: [B_pad, S] int32 -> pooled features [B_pad, H] f32."""
    batch_pad, seq = ids.shape
    vocab_pad, hidden = ew_bf16.shape
    tb = 8  # multiple of 8; batch_pad % 8 == 0 by construction (>=2 tiles when B>=16)
    ts = _pick_seq_tile(seq, tb, vocab_pad, hidden)
    grid = (batch_pad // tb, seq // ts)
    kern = functools.partial(_fused_gather_gelu_pool_kernel,
                             pooling=pooling, inv_s=1.0 / seq,
                             vocab_pad=vocab_pad, tb=tb, ts=ts, hidden=hidden)
    return pl.pallas_call(
        kern,
        out_shape=jax.ShapeDtypeStruct((batch_pad, hidden), jnp.float32),
        grid=grid,
        in_specs=[
            pl.BlockSpec((tb, ts), lambda i, j: (i, j)),
            pl.BlockSpec((vocab_pad, hidden), lambda i, j: (0, 0)),  # EW resident
            pl.BlockSpec((1, hidden), lambda i, j: (0, 0)),
        ],
        # Same output block across the seq axis -> resident accumulator output.
        out_specs=pl.BlockSpec((tb, hidden), lambda i, j: (i, 0)),
        compiler_params=pltpu.CompilerParams(
            dimension_semantics=("parallel", "arbitrary"),
            vmem_limit_bytes=32 * 1024 * 1024),
    )(ids, ew_bf16, b_f32)


# ----------------------------------------------------------------------------
# FeatureExtractor (JAX/Pallas version)
# ----------------------------------------------------------------------------
class FeatureExtractorPallas:
    """Frozen synthetic text encoder + pooling, mirroring FeatureExtractor.forward."""

    def __init__(self, vocab_size=1000, hidden=128, pooling_strategy="cls", seed=0):
        self.pooling_strategy = pooling_strategy
        self.feature_dim = hidden
        self.vocab_size = vocab_size
        self.freeze = True  # parameters are constants; effectively frozen
        key = jax.random.PRNGKey(seed)
        k_emb, k_w, k_b = jax.random.split(key, 3)
        # Deterministic synthetic parameters (no checkpoint load).
        self.embedding = (jax.random.normal(k_emb, (vocab_size, hidden), jnp.float32)
                          * 0.02)
        self.W = jax.random.normal(k_w, (hidden, hidden), jnp.float32) * 0.02
        self.b = jax.random.normal(k_b, (1, hidden), jnp.float32) * 0.02
        # Frozen encoder: fold the dense layer into the table once (f32 matmul),
        # store bf16 for the MXU, pad vocab to a multiple of 128 with zero rows
        # (padded rows are never selected by the in-kernel one-hot).
        ew = jnp.dot(self.embedding, self.W)                   # [V, H] f32
        self.vocab_pad = _round_up(vocab_size, 128)
        ew = jnp.pad(ew, ((0, self.vocab_pad - vocab_size), (0, 0)))
        self.ew_bf16 = ew.astype(jnp.bfloat16)

    def forward(self, input_ids, attention_mask=None):
        """input_ids: [B, S] int -> features [B, feature_dim] float32.

        attention_mask is accepted for API parity; the spec's pooling
        (hidden_states.mean(dim=1) / .max(dim=1)[0]) is unmasked, so it is
        intentionally unused here.
        """
        del attention_mask
        batch, _ = input_ids.shape
        # Unknown strategies fall back to 'cls', matching the PyTorch spec.
        strategy = (self.pooling_strategy
                    if self.pooling_strategy in ("cls", "mean", "max") else "cls")
        ids = input_ids.astype(jnp.int32)

        if strategy == "cls":
            # Only token 0 contributes: gather + encode just that token.
            ids0 = _pad_batch(ids[:, :1], 8)                   # [B_pad, 1]
            feats = _encode_cls(ids0, self.ew_bf16, self.b)
        else:
            ids_p = _pad_batch(ids, 8)                         # [B_pad, S]
            feats = _encode_and_pool(ids_p, self.ew_bf16, self.b, strategy)
        return feats[:batch]

    def __call__(self, *args, **kwargs):
        return self.forward(*args, **kwargs)


# Pure-JAX reference for correctness checking (same bf16-EW / f32 math).
def _reference_forward(fe, input_ids):
    batch, seq = input_ids.shape
    hidden = fe.feature_dim
    ew = fe.ew_bf16[:fe.vocab_size].astype(jnp.float32)
    x = jnp.take(ew, input_ids.reshape(-1), axis=0)
    h = _gelu_tanh(x + fe.b).reshape(batch, seq, hidden)
    strategy = (fe.pooling_strategy
                if fe.pooling_strategy in ("cls", "mean", "max") else "cls")
    if strategy == "mean":
        return h.mean(axis=1)
    if strategy == "max":
        return h.max(axis=1)
    return h[:, 0, :]


if __name__ == "__main__":
    B, S, H, V = 2, 8, 128, 1000
    key = jax.random.PRNGKey(0)
    input_ids = jax.random.randint(key, (B, S), 0, V, dtype=jnp.int32)
    attention_mask = jnp.ones((B, S), dtype=jnp.int32)

    ok = True
    for strategy in ("cls", "mean", "max"):
        fe = FeatureExtractorPallas(vocab_size=V, hidden=H,
                                    pooling_strategy=strategy, seed=0)
        feats = jax.block_until_ready(fe(input_ids, attention_mask=attention_mask))
        ref = _reference_forward(fe, input_ids)
        assert feats.shape == (B, H), feats.shape
        if not jnp.allclose(feats, ref, atol=2e-3, rtol=2e-3):
            ok = False

    if ok:
        print("KERNEL_OK")
</pallas_src>

<mosaic_0001>
module attributes {stable_mosaic.version = 11 : i64} {
  func.func @_cls_gather_gelu_kernel(%arg0: i32, %arg1: memref<8x1xi32, #tpu.memory_space<vmem>>, %arg2: memref<1024x128xbf16, #tpu.memory_space<vmem>>, %arg3: memref<1x128xf32, #tpu.memory_space<vmem>>, %arg4: memref<8x128xf32, #tpu.memory_space<vmem>>) attributes {dimension_semantics = [#tpu.dimension_semantics<parallel>], iteration_bounds = array<i64: 1>, scalar_prefetch = 0 : i64, scratch_operands = 0 : i64, tpu.core_type = #tpu.core_type<tc>, window_params = [{transform_indices = @transform_0, window_bounds = array<i64: 8, 1>}, {pipeline_mode = #tpu.pipeline_mode<synchronous>, transform_indices = @transform_1, window_bounds = array<i64: 1024, 128>}, {pipeline_mode = #tpu.pipeline_mode<synchronous>, transform_indices = @transform_2, window_bounds = array<i64: 1, 128>}, {transform_indices = @transform_3, window_bounds = array<i64: 8, 128>}]} {
    %c0 = arith.constant 0 : index
    %c0_0 = arith.constant 0 : index
    %0 = vector.load %arg1[%c0, %c0_0] : memref<8x1xi32, #tpu.memory_space<vmem>>, vector<8x1xi32>
    %1 = tpu.iota {dimensions = array<i32: 1>} : vector<8x1024xi32>
    %2 = vector.broadcast %0 : vector<8x1xi32> to vector<8x1024xi32>
    %3 = arith.cmpi eq, %1, %2 : vector<8x1024xi32>
    %4 = arith.extui %3 : vector<8x1024xi1> to vector<8x1024xi32>
    %5 = arith.sitofp %4 : vector<8x1024xi32> to vector<8x1024xf32>
    %6 = arith.truncf %5 : vector<8x1024xf32> to vector<8x1024xbf16>
    %c0_1 = arith.constant 0 : index
    %c0_2 = arith.constant 0 : index
    %7 = vector.load %arg2[%c0_1, %c0_2] : memref<1024x128xbf16, #tpu.memory_space<vmem>>, vector<1024x128xbf16>
    %cst = arith.constant dense<0.000000e+00> : vector<8x128xf32>
    %8 = tpu.matmul %6, %7, %cst {dimension_numbers = #tpu.dot_dimension_numbers<[1], [0], [0], [1], [0, 0, 1, 1], [], []>} : vector<8x1024xbf16>, vector<1024x128xbf16>, vector<8x128xf32> -> vector<8x128xf32>
    %c0_3 = arith.constant 0 : index
    %c0_4 = arith.constant 0 : index
    %9 = vector.load %arg3[%c0_3, %c0_4] : memref<1x128xf32, #tpu.memory_space<vmem>>, vector<1x128xf32>
    %10 = vector.broadcast %9 : vector<1x128xf32> to vector<8x128xf32>
    %11 = arith.addf %8, %10 : vector<8x128xf32>
    %cst_5 = arith.constant 4.471500e-02 : f32
    %12 = vector.broadcast %cst_5 : f32 to vector<8x128xf32>
    %13 = arith.mulf %12, %11 : vector<8x128xf32>
    %14 = arith.mulf %13, %11 : vector<8x128xf32>
    %cst_6 = arith.constant 1.000000e+00 : f32
    %15 = vector.broadcast %cst_6 : f32 to vector<8x128xf32>
    %16 = arith.addf %15, %14 : vector<8x128xf32>
    %17 = arith.mulf %11, %16 : vector<8x128xf32>
    %cst_7 = arith.constant 5.000000e-01 : f32
    %18 = vector.broadcast %cst_7 : f32 to vector<8x128xf32>
    %19 = arith.mulf %18, %11 : vector<8x128xf32>
    %cst_8 = arith.constant 0.797884583 : f32
    %20 = vector.broadcast %cst_8 : f32 to vector<8x128xf32>
    %21 = arith.mulf %20, %17 : vector<8x128xf32>
    %22 = math.tanh %21 : vector<8x128xf32>
    %cst_9 = arith.constant 1.000000e+00 : f32
    %23 = vector.broadcast %cst_9 : f32 to vector<8x128xf32>
    %24 = arith.addf %23, %22 : vector<8x128xf32>
    %25 = arith.mulf %19, %24 : vector<8x128xf32>
    %c0_10 = arith.constant 0 : index
    %c0_11 = arith.constant 0 : index
    %26 = vector.load %arg4[%c0_10, %c0_11] : memref<8x128xf32, #tpu.memory_space<vmem>>, vector<8x128xf32>
    tpu.vector_store %arg4[%c0_10, %c0_11], %25 {strides = array<i32>} : memref<8x128xf32, #tpu.memory_space<vmem>>, vector<8x128xf32>,
    return
  }
  func.func @transform_0(%arg0: i32) -> (i32, i32) {
    %c0_i32 = arith.constant 0 : i32
    %c0_i32_0 = arith.constant 0 : i32
    return %arg0, %c0_i32 : i32, i32
  }
  func.func @transform_1(%arg0: i32) -> (i32, i32) {
    %c0_i32 = arith.constant 0 : i32
    %c0_i32_0 = arith.constant 0 : i32
    %c0_i32_1 = arith.constant 0 : i32
    return %c0_i32, %c0_i32_0 : i32, i32
  }
  func.func @transform_2(%arg0: i32) -> (i32, i32) {
    %c0_i32 = arith.constant 0 : i32
    %c0_i32_0 = arith.constant 0 : i32
    %c0_i32_1 = arith.constant 0 : i32
    return %c0_i32, %c0_i32_0 : i32, i32
  }
  func.func @transform_3(%arg0: i32) -> (i32, i32) {
    %c0_i32 = arith.constant 0 : i32
    %c0_i32_0 = arith.constant 0 : i32
    return %arg0, %c0_i32 : i32, i32
  }
}

</mosaic_0001>

<llo_original>
// kernel: tpu_custom_call.1
$region0: #{tpu_custom_call.1}
  #allocation0 [shape = 'u32[]', space=smem, size = 0x4, offset = 0x4, fixed_abs, tag = 'smem constant byte address 0x4 - core index']
  #allocation1 [shape = 'u32[144,128]{1,0:T(1,128)}', space=vmem, size = 0x12000, scoped, tag = 'internal scratch']
  %s0 = inlined_call_operand.vmem [shape: s32[8,1], index: 0, kind: input, shape index: {}]
  %s1 = inlined_call_operand.hbm [shape: bf16[1024,128], index: 1, kind: input, shape index: {}]
  %s2 = inlined_call_operand.vmem [shape: f32[1,128], index: 2, kind: input, shape index: {}]
  %s3 = inlined_call_operand.hbm [shape: f32[8,128], index: 3, kind: output, shape index: {}]
  %s4 = sld [smem:[#allocation0]]
  $region26: #{tpu_custom_call.1} parent=0
    _
  %s6 = ssub.s32 1, %s4
  %s7 = scalar_select 0, %s6, %s4
  $region1: #{tpu_custom_call.1} parent=0
    #allocation2 [shape = 'u8[262144]{0}', space=vmem, size = 0x40000, scoped, tag = 'input window, operand 1, single buffered']
    #allocation3 [shape = 's32[1]{0}', space=sflag, size = 0x4, scoped, tag = 'scoped memory for tpu_custom_call.1']
    #allocation4 [shape = 's32[1]{0}', space=sflag, size = 0x4, scoped, tag = 'scoped memory for tpu_custom_call.1']
    #allocation5 [shape = 'u8[4096]{0}', space=vmem, size = 0x1000, scoped, tag = 'output window, operand 0, single buffered']
    %8 = vsyncpa [#allocation3], 0
    %9 = vsyncpa [#allocation4], 0
    // Predicated region
    $region2: #{tpu_custom_call.1} parent=1 // pred_check
      _
    $region3: #{tpu_custom_call.1} parent=1 // pred_check_branch
      %11 = sbr.rel (0) target = $region5
    $region4: #{tpu_custom_call.1} parent=1 // pred_region
      _
    $region5: #{tpu_custom_call.1} parent=1 // pred_fallthru
      _
    // Predicated region
    $region6: #{tpu_custom_call.1} parent=1 // pred_check
      _
    $region7: #{tpu_custom_call.1} parent=1 // pred_check_branch
      %13 = sbr.rel (0) target = $region9
    $region8: #{tpu_custom_call.1} parent=1 // pred_region
      %s15 = ssub.s32 8192, 8192
      %16 = vsyncadd [#allocation3], %s15
      %s17 = sshll.u32 [#allocation2], 4
      %s18 = int_to_ptr.vmem [resolvable:$true] %s17
      %23 = dma.hbm_to_vmem [thread:$0]  %s1, 8192, %s18, [#allocation3], 64, 64, 4
    $region9: #{tpu_custom_call.1} parent=1 // pred_fallthru
      _
    // Predicated region
    $region10: #{tpu_custom_call.1} parent=1 // pred_check
      _
    $region11: #{tpu_custom_call.1} parent=1 // pred_check_branch
      %25 = sbr.rel (0) target = $region13
    $region12: #{tpu_custom_call.1} parent=1 // pred_region
      _
    $region13: #{tpu_custom_call.1} parent=1 // pred_fallthru
      _
    // Predicated region
    $region14: #{tpu_custom_call.1} parent=1 // pred_check
      _
    $region15: #{tpu_custom_call.1} parent=1 // pred_check_branch
      %27 = sbr.rel (0) target = $region17
    $region16: #{tpu_custom_call.1} parent=1 // pred_region
      %28 = dma.done [#allocation3], 8192
    $region17: #{tpu_custom_call.1} parent=1 // pred_fallthru
      _
    %v30 = vld [vmem:[%s0] sm:$0xff]
    %v31 = vlaneseq
    %v32 = vand.u32 %v31, 127
    %v33 = vadd.s32 %v32, 128
    %v34 = vadd.s32 %v32, 256
    %v35 = vadd.s32 %v32, 384
    %v36 = vadd.s32 %v32, 512
    %v37 = vadd.s32 %v32, 640
    %v38 = vadd.s32 %v32, 768
    %v39 = vadd.s32 %v32, 896
    %40 = vset.pattern.permute.xlu0 0
    %41 = vperm.xlu0 %40, %v30
    %v42 = vpop.permute.xlu0 %41
    %vm43 = vcmp.eq.s32.totalorder %v32, %v42
    %vm44 = vcmp.eq.s32.totalorder %v33, %v42
    %vm45 = vcmp.eq.s32.totalorder %v34, %v42
    %vm46 = vcmp.eq.s32.totalorder %v35, %v42
    %vm47 = vcmp.eq.s32.totalorder %v36, %v42
    %vm48 = vcmp.eq.s32.totalorder %v37, %v42
    %vm49 = vcmp.eq.s32.totalorder %v38, %v42
    %vm50 = vcmp.eq.s32.totalorder %v39, %v42
    %v51 = vsel %vm43, 1, 0
    %v52 = vsel %vm44, 1, 0
    %v53 = vsel %vm45, 1, 0
    %v54 = vsel %vm46, 1, 0
    %v55 = vsel %vm47, 1, 0
    %v56 = vsel %vm48, 1, 0
    %v57 = vsel %vm49, 1, 0
    %v58 = vsel %vm50, 1, 0
    %v59 = vcvt.s32.f32 %v51
    %v60 = vcvt.s32.f32 %v52
    %v61 = vcvt.s32.f32 %v53
    %v62 = vcvt.s32.f32 %v54
    %v63 = vcvt.s32.f32 %v55
    %v64 = vcvt.s32.f32 %v56
    %v65 = vcvt.s32.f32 %v57
    %v66 = vcvt.s32.f32 %v58
    %v67 = vpack.c.bf16 %v59, %v59
    %v68 = vpack.c.bf16 %v60, %v60
    %v69 = vpack.c.bf16 %v61, %v61
    %v70 = vpack.c.bf16 %v62, %v62
    %v71 = vpack.c.bf16 %v63, %v63
    %v72 = vpack.c.bf16 %v64, %v64
    %v73 = vpack.c.bf16 %v65, %v65
    %v74 = vpack.c.bf16 %v66, %v66
    %v75 = vld [vmem:[#allocation2] sm:$0xf]
    %v76 = vld [vmem:[#allocation2 + $0x4] sm:$0xf]
    %v77 = vld [vmem:[#allocation2 + $0x8] sm:$0xf]
    %v78 = vld [vmem:[#allocation2 + $0xc] sm:$0xf]
    %v79 = vld [vmem:[#allocation2 + $0x10] sm:$0xf]
    %v80 = vld [vmem:[#allocation2 + $0x14] sm:$0xf]
    %v81 = vld [vmem:[#allocation2 + $0x18] sm:$0xf]
    %v82 = vld [vmem:[#allocation2 + $0x1c] sm:$0xf]
    %v83 = vld [vmem:[#allocation2 + $0x20] sm:$0xf]
    %v84 = vld [vmem:[#allocation2 + $0x24] sm:$0xf]
    %v85 = vld [vmem:[#allocation2 + $0x28] sm:$0xf]
    %v86 = vld [vmem:[#allocation2 + $0x2c] sm:$0xf]
    %v87 = vld [vmem:[#allocation2 + $0x30] sm:$0xf]
    %v88 = vld [vmem:[#allocation2 + $0x34] sm:$0xf]
    %v89 = vld [vmem:[#allocation2 + $0x38] sm:$0xf]
    %v90 = vld [vmem:[#allocation2 + $0x3c] sm:$0xf]
    %v91 = vld [vmem:[#allocation2 + $0x40] sm:$0xf]
    %v92 = vld [vmem:[#allocation2 + $0x44] sm:$0xf]
    %v93 = vld [vmem:[#allocation2 + $0x48] sm:$0xf]
    %v94 = vld [vmem:[#allocation2 + $0x4c] sm:$0xf]
    %v95 = vld [vmem:[#allocation2 + $0x50] sm:$0xf]
    %v96 = vld [vmem:[#allocation2 + $0x54] sm:$0xf]
    %v97 = vld [vmem:[#allocation2 + $0x58] sm:$0xf]
    %v98 = vld [vmem:[#allocation2 + $0x5c] sm:$0xf]
    %v99 = vld [vmem:[#allocation2 + $0x60] sm:$0xf]
    %v100 = vld [vmem:[#allocation2 + $0x64] sm:$0xf]
    %v101 = vld [vmem:[#allocation2 + $0x68] sm:$0xf]
    %v102 = vld [vmem:[#allocation2 + $0x6c] sm:$0xf]
    %v103 = vld [vmem:[#allocation2 + $0x70] sm:$0xf]
    %v104 = vld [vmem:[#allocation2 + $0x74] sm:$0xf]
    %v105 = vld [vmem:[#allocation2 + $0x78] sm:$0xf]
    %v106 = vld [vmem:[#allocation2 + $0x7c] sm:$0xf]
    %v107 = vld [vmem:[#allocation2 + $0x80] sm:$0xf]
    %v108 = vld [vmem:[#allocation2 + $0x84] sm:$0xf]
    %v109 = vld [vmem:[#allocation2 + $0x88] sm:$0xf]
    %v110 = vld [vmem:[#allocation2 + $0x8c] sm:$0xf]
    %v111 = vld [vmem:[#allocation2 + $0x90] sm:$0xf]
    %v112 = vld [vmem:[#allocation2 + $0x94] sm:$0xf]
    %v113 = vld [vmem:[#allocation2 + $0x98] sm:$0xf]
    %v114 = vld [vmem:[#allocation2 + $0x9c] sm:$0xf]
    %v115 = vld [vmem:[#allocation2 + $0xa0] sm:$0xf]
    %v116 = vld [vmem:[#allocation2 + $0xa4] sm:$0xf]
    %v117 = vld [vmem:[#allocation2 + $0xa8] sm:$0xf]
    %v118 = vld [vmem:[#allocation2 + $0xac] sm:$0xf]
    %v119 = vld [vmem:[#allocation2 + $0xb0] sm:$0xf]
    %v120 = vld [vmem:[#allocation2 + $0xb4] sm:$0xf]
    %v121 = vld [vmem:[#allocation2 + $0xb8] sm:$0xf]
    %v122 = vld [vmem:[#allocation2 + $0xbc] sm:$0xf]
    %v123 = vld [vmem:[#allocation2 + $0xc0] sm:$0xf]
    %v124 = vld [vmem:[#allocation2 + $0xc4] sm:$0xf]
    %v125 = vld [vmem:[#allocation2 + $0xc8] sm:$0xf]
    %v126 = vld [vmem:[#allocation2 + $0xcc] sm:$0xf]
    %v127 = vld [vmem:[#allocation2 + $0xd0] sm:$0xf]
    %v128 = vld [vmem:[#allocation2 + $0xd4] sm:$0xf]
    %v129 = vld [vmem:[#allocation2 + $0xd8] sm:$0xf]
    %v130 = vld [vmem:[#allocation2 + $0xdc] sm:$0xf]
    %v131 = vld [vmem:[#allocation2 + $0xe0] sm:$0xf]
    %v132 = vld [vmem:[#allocation2 + $0xe4] sm:$0xf]
    %v133 = vld [vmem:[#allocation2 + $0xe8] sm:$0xf]
    %v134 = vld [vmem:[#allocation2 + $0xec] sm:$0xf]
    %v135 = vld [vmem:[#allocation2 + $0xf0] sm:$0xf]
    %v136 = vld [vmem:[#allocation2 + $0xf4] sm:$0xf]
    %v137 = vld [vmem:[#allocation2 + $0xf8] sm:$0xf]
    %v138 = vld [vmem:[#allocation2 + $0xfc] sm:$0xf]
    %v139 = vld [vmem:[#allocation2 + $0x100] sm:$0xf]
    %v140 = vld [vmem:[#allocation2 + $0x104] sm:$0xf]
    %v141 = vld [vmem:[#allocation2 + $0x108] sm:$0xf]
    %v142 = vld [vmem:[#allocation2 + $0x10c] sm:$0xf]
    %v143 = vld [vmem:[#allocation2 + $0x110] sm:$0xf]
    %v144 = vld [vmem:[#allocation2 + $0x114] sm:$0xf]
    %v145 = vld [vmem:[#allocation2 + $0x118] sm:$0xf]
    %v146 = vld [vmem:[#allocation2 + $0x11c] sm:$0xf]
    %v147 = vld [vmem:[#allocation2 + $0x120] sm:$0xf]
    %v148 = vld [vmem:[#allocation2 + $0x124] sm:$0xf]
    %v149 = vld [vmem:[#allocation2 + $0x128] sm:$0xf]
    %v150 = vld [vmem:[#allocation2 + $0x12c] sm:$0xf]
    %v151 = vld [vmem:[#allocation2 + $0x130] sm:$0xf]
    %v152 = vld [vmem:[#allocation2 + $0x134] sm:$0xf]
    %v153 = vld [vmem:[#allocation2 + $0x138] sm:$0xf]
    %v154 = vld [vmem:[#allocation2 + $0x13c] sm:$0xf]
    %v155 = vld [vmem:[#allocation2 + $0x140] sm:$0xf]
    %v156 = vld [vmem:[#allocation2 + $0x144] sm:$0xf]
    %v157 = vld [vmem:[#allocation2 + $0x148] sm:$0xf]
    %v158 = vld [vmem:[#allocation2 + $0x14c] sm:$0xf]
    %v159 = vld [vmem:[#allocation2 + $0x150] sm:$0xf]
    %v160 = vld [vmem:[#allocation2 + $0x154] sm:$0xf]
    %v161 = vld [vmem:[#allocation2 + $0x158] sm:$0xf]
    %v162 = vld [vmem:[#allocation2 + $0x15c] sm:$0xf]
    %v163 = vld [vmem:[#allocation2 + $0x160] sm:$0xf]
    %v164 = vld [vmem:[#allocation2 + $0x164] sm:$0xf]
    %v165 = vld [vmem:[#allocation2 + $0x168] sm:$0xf]
    %v166 = vld [vmem:[#allocation2 + $0x16c] sm:$0xf]
    %v167 = vld [vmem:[#allocation2 + $0x170] sm:$0xf]
    %v168 = vld [vmem:[#allocation2 + $0x174] sm:$0xf]
    %v169 = vld [vmem:[#allocation2 + $0x178] sm:$0xf]
    %v170 = vld [vmem:[#allocation2 + $0x17c] sm:$0xf]
    %v171 = vld [vmem:[#allocation2 + $0x180] sm:$0xf]
    %v172 = vld [vmem:[#allocation2 + $0x184] sm:$0xf]
    %v173 = vld [vmem:[#allocation2 + $0x188] sm:$0xf]
    %v174 = vld [vmem:[#allocation2 + $0x18c] sm:$0xf]
    %v175 = vld [vmem:[#allocation2 + $0x190] sm:$0xf]
    %v176 = vld [vmem:[#allocation2 + $0x194] sm:$0xf]
    %v177 = vld [vmem:[#allocation2 + $0x198] sm:$0xf]
    %v178 = vld [vmem:[#allocation2 + $0x19c] sm:$0xf]
    %v179 = vld [vmem:[#allocation2 + $0x1a0] sm:$0xf]
    %v180 = vld [vmem:[#allocation2 + $0x1a4] sm:$0xf]
    %v181 = vld [vmem:[#allocation2 + $0x1a8] sm:$0xf]
    %v182 = vld [vmem:[#allocation2 + $0x1ac] sm:$0xf]
    %v183 = vld [vmem:[#allocation2 + $0x1b0] sm:$0xf]
    %v184 = vld [vmem:[#allocation2 + $0x1b4] sm:$0xf]
    %v185 = vld [vmem:[#allocation2 + $0x1b8] sm:$0xf]
    %v186 = vld [vmem:[#allocation2 + $0x1bc] sm:$0xf]
    %v187 = vld [vmem:[#allocation2 + $0x1c0] sm:$0xf]
    %v188 = vld [vmem:[#allocation2 + $0x1c4] sm:$0xf]
    %v189 = vld [vmem:[#allocation2 + $0x1c8] sm:$0xf]
    %v190 = vld [vmem:[#allocation2 + $0x1cc] sm:$0xf]
    %v191 = vld [vmem:[#allocation2 + $0x1d0] sm:$0xf]
    %v192 = vld [vmem:[#allocation2 + $0x1d4] sm:$0xf]
    %v193 = vld [vmem:[#allocation2 + $0x1d8] sm:$0xf]
    %v194 = vld [vmem:[#allocation2 + $0x1dc] sm:$0xf]
    %v195 = vld [vmem:[#allocation2 + $0x1e0] sm:$0xf]
    %v196 = vld [vmem:[#allocation2 + $0x1e4] sm:$0xf]
    %v197 = vld [vmem:[#allocation2 + $0x1e8] sm:$0xf]
    %v198 = vld [vmem:[#allocation2 + $0x1ec] sm:$0xf]
    %v199 = vld [vmem:[#allocation2 + $0x1f0] sm:$0xf]
    %v200 = vld [vmem:[#allocation2 + $0x1f4] sm:$0xf]
    %v201 = vld [vmem:[#allocation2 + $0x1f8] sm:$0xf]
    %v202 = vld [vmem:[#allocation2 + $0x1fc] sm:$0xf]
    %v203 = vld [vmem:[%s2] sm:$0x1]
    %v205 = vlaneseq
    %v206 = vshrl.u32 %v205, 7
    %v207 = vsub.s32 0, %v206
    %v208 = vrot.slane %v203, %v207
    %v338 = vunpack.c.l.b16 %v75
    %v339 = vunpack.c.l.b16 %v76
    %v340 = vunpack.c.l.b16 %v77
    %v341 = vunpack.c.l.b16 %v78
    %v342 = vunpack.c.l.b16 %v79
    %v343 = vunpack.c.l.b16 %v80
    %v344 = vunpack.c.l.b16 %v81
    %v345 = vunpack.c.l.b16 %v82
    %v346 = vunpack.c.l.b16 %v83
    %v347 = vunpack.c.l.b16 %v84
    %v348 = vunpack.c.l.b16 %v85
    %v349 = vunpack.c.l.b16 %v86
    %v350 = vunpack.c.l.b16 %v87
    %v351 = vunpack.c.l.b16 %v88
    %v352 = vunpack.c.l.b16 %v89
    %v353 = vunpack.c.l.b16 %v90
    %v354 = vunpack.c.l.b16 %v91
    %v355 = vunpack.c.l.b16 %v92
    %v356 = vunpack.c.l.b16 %v93
    %v357 = vunpack.c.l.b16 %v94
    %v358 = vunpack.c.l.b16 %v95
    %v359 = vunpack.c.l.b16 %v96
    %v360 = vunpack.c.l.b16 %v97
    %v361 = vunpack.c.l.b16 %v98
    %v362 = vunpack.c.l.b16 %v99
    %v363 = vunpack.c.l.b16 %v100
    %v364 = vunpack.c.l.b16 %v101
    %v365 = vunpack.c.l.b16 %v102
    %v366 = vunpack.c.l.b16 %v103
    %v367 = vunpack.c.l.b16 %v104
    %v368 = vunpack.c.l.b16 %v105
    %v369 = vunpack.c.l.b16 %v106
    %v370 = vunpack.c.l.b16 %v107
    %v371 = vunpack.c.l.b16 %v108
    %v372 = vunpack.c.l.b16 %v109
    %v373 = vunpack.c.l.b16 %v110
    %v374 = vunpack.c.l.b16 %v111
    %v375 = vunpack.c.l.b16 %v112
    %v376 = vunpack.c.l.b16 %v113
    %v377 = vunpack.c.l.b16 %v114
    %v378 = vunpack.c.l.b16 %v115
    %v379 = vunpack.c.l.b16 %v116
    %v380 = vunpack.c.l.b16 %v117
    %v381 = vunpack.c.l.b16 %v118
    %v382 = vunpack.c.l.b16 %v119
    %v383 = vunpack.c.l.b16 %v120
    %v384 = vunpack.c.l.b16 %v121
    %v385 = vunpack.c.l.b16 %v122
    %v386 = vunpack.c.l.b16 %v123
    %v387 = vunpack.c.l.b16 %v124
    %v388 = vunpack.c.l.b16 %v125
    %v389 = vunpack.c.l.b16 %v126
    %v390 = vunpack.c.l.b16 %v127
    %v391 = vunpack.c.l.b16 %v128
    %v392 = vunpack.c.l.b16 %v129
    %v393 = vunpack.c.l.b16 %v130
    %v394 = vunpack.c.l.b16 %v131
    %v395 = vunpack.c.l.b16 %v132
    %v396 = vunpack.c.l.b16 %v133
    %v397 = vunpack.c.l.b16 %v134
    %v398 = vunpack.c.l.b16 %v135
    %v399 = vunpack.c.l.b16 %v136
    %v400 = vunpack.c.l.b16 %v137
    %v401 = vunpack.c.l.b16 %v138
    %v402 = vunpack.c.l.b16 %v139
    %v403 = vunpack.c.l.b16 %v140
    %v404 = vunpack.c.l.b16 %v141
    %v405 = vunpack.c.l.b16 %v142
    %v406 = vunpack.c.l.b16 %v143
    %v407 = vunpack.c.l.b16 %v144
    %v408 = vunpack.c.l.b16 %v145
    %v409 = vunpack.c.l.b16 %v146
    %v410 = vunpack.c.l.b16 %v147
    %v411 = vunpack.c.l.b16 %v148
    %v412 = vunpack.c.l.b16 %v149
    %v413 = vunpack.c.l.b16 %v150
    %v414 = vunpack.c.l.b16 %v151
    %v415 = vunpack.c.l.b16 %v152
    %v416 = vunpack.c.l.b16 %v153
    %v417 = vunpack.c.l.b16 %v154
    %v418 = vunpack.c.l.b16 %v155
    %v419 = vunpack.c.l.b16 %v156
    %v420 = vunpack.c.l.b16 %v157
    %v421 = vunpack.c.l.b16 %v158
    %v422 = vunpack.c.l.b16 %v159
    %v423 = vunpack.c.l.b16 %v160
    %v424 = vunpack.c.l.b16 %v161
    %v425 = vunpack.c.l.b16 %v162
    %v426 = vunpack.c.l.b16 %v163
    %v427 = vunpack.c.l.b16 %v164
    %v428 = vunpack.c.l.b16 %v165
    %v429 = vunpack.c.l.b16 %v166
    %v430 = vunpack.c.l.b16 %v167
    %v431 = vunpack.c.l.b16 %v168
    %v432 = vunpack.c.l.b16 %v169
    %v433 = vunpack.c.l.b16 %v170
    %v434 = vunpack.c.l.b16 %v171
    %v435 = vunpack.c.l.b16 %v172
    %v436 = vunpack.c.l.b16 %v173
    %v437 = vunpack.c.l.b16 %v174
    %v438 = vunpack.c.l.b16 %v175
    %v439 = vunpack.c.l.b16 %v176
    %v440 = vunpack.c.l.b16 %v177
    %v441 = vunpack.c.l.b16 %v178
    %v442 = vunpack.c.l.b16 %v179
    %v443 = vunpack.c.l.b16 %v180
    %v444 = vunpack.c.l.b16 %v181
    %v445 = vunpack.c.l.b16 %v182
    %v446 = vunpack.c.l.b16 %v183
    %v447 = vunpack.c.l.b16 %v184
    %v448 = vunpack.c.l.b16 %v185
    %v449 = vunpack.c.l.b16 %v186
    %v450 = vunpack.c.l.b16 %v187
    %v451 = vunpack.c.l.b16 %v188
    %v452 = vunpack.c.l.b16 %v189
    %v453 = vunpack.c.l.b16 %v190
    %v454 = vunpack.c.l.b16 %v191
    %v455 = vunpack.c.l.b16 %v192
    %v456 = vunpack.c.l.b16 %v193
    %v457 = vunpack.c.l.b16 %v194
    %v458 = vunpack.c.l.b16 %v195
    %v459 = vunpack.c.l.b16 %v196
    %v460 = vunpack.c.l.b16 %v197
    %v461 = vunpack.c.l.b16 %v198
    %v462 = vunpack.c.l.b16 %v199
    %v463 = vunpack.c.l.b16 %v200
    %v464 = vunpack.c.l.b16 %v201
    %v465 = vunpack.c.l.b16 %v202
    %v466 = vpack.c.b16 %v339, %v338
    %v467 = vpack.c.b16 %v341, %v340
    %v468 = vpack.c.b16 %v343, %v342
    %v469 = vpack.c.b16 %v345, %v344
    %v470 = vpack.c.b16 %v347, %v346
    %v471 = vpack.c.b16 %v349, %v348
    %v472 = vpack.c.b16 %v351, %v350
    %v473 = vpack.c.b16 %v353, %v352
    %v474 = vpack.c.b16 %v355, %v354
    %v475 = vpack.c.b16 %v357, %v356
    %v476 = vpack.c.b16 %v359, %v358
    %v477 = vpack.c.b16 %v361, %v360
    %v478 = vpack.c.b16 %v363, %v362
    %v479 = vpack.c.b16 %v365, %v364
    %v480 = vpack.c.b16 %v367, %v366
    %v481 = vpack.c.b16 %v369, %v368
    %v482 = vpack.c.b16 %v371, %v370
    %v483 = vpack.c.b16 %v373, %v372
    %v484 = vpack.c.b16 %v375, %v374
    %v485 = vpack.c.b16 %v377, %v376
    %v486 = vpack.c.b16 %v379, %v378
    %v487 = vpack.c.b16 %v381, %v380
    %v488 = vpack.c.b16 %v383, %v382
    %v489 = vpack.c.b16 %v385, %v384
    %v490 = vpack.c.b16 %v387, %v386
    %v491 = vpack.c.b16 %v389, %v388
    %v492 = vpack.c.b16 %v391, %v390
    %v493 = vpack.c.b16 %v393, %v392
    %v494 = vpack.c.b16 %v395, %v394
    %v495 = vpack.c.b16 %v397, %v396
    %v496 = vpack.c.b16 %v399, %v398
    %v497 = vpack.c.b16 %v401, %v400
    %v498 = vpack.c.b16 %v403, %v402
    %v499 = vpack.c.b16 %v405, %v404
    %v500 = vpack.c.b16 %v407, %v406
    %v501 = vpack.c.b16 %v409, %v408
    %v502 = vpack.c.b16 %v411, %v410
    %v503 = vpack.c.b16 %v413, %v412
    %v504 = vpack.c.b16 %v415, %v414
    %v505 = vpack.c.b16 %v417, %v416
    %v506 = vpack.c.b16 %v419, %v418
    %v507 = vpack.c.b16 %v421, %v420
    %v508 = vpack.c.b16 %v423, %v422
    %v509 = vpack.c.b16 %v425, %v424
    %v510 = vpack.c.b16 %v427, %v426
    %v511 = vpack.c.b16 %v429, %v428
    %v512 = vpack.c.b16 %v431, %v430
    %v513 = vpack.c.b16 %v433, %v432
    %v514 = vpack.c.b16 %v435, %v434
    %v515 = vpack.c.b16 %v437, %v436
    %v516 = vpack.c.b16 %v439, %v438
    %v517 = vpack.c.b16 %v441, %v440
    %v518 = vpack.c.b16 %v443, %v442
    %v519 = vpack.c.b16 %v445, %v444
    %v520 = vpack.c.b16 %v447, %v446
    %v521 = vpack.c.b16 %v449, %v448
    %v522 = vpack.c.b16 %v451, %v450
    %v523 = vpack.c.b16 %v453, %v452
    %v524 = vpack.c.b16 %v455, %v454
    %v525 = vpack.c.b16 %v457, %v456
    %v526 = vpack.c.b16 %v459, %v458
    %v527 = vpack.c.b16 %v461, %v460
    %v528 = vpack.c.b16 %v463, %v462
    %v529 = vpack.c.b16 %v465, %v464
    %594 = vmatprep.subr.bf16.mxu0 0
    %595 = vmatpush1.bf16.msra.mxu0 %v473
    %596 = vmatprep.subr.bf16.mxu0 0
    %597 = vmatpush1.bf16.msra.mxu0 %v472
    %598 = vmatprep.subr.bf16.mxu0 0
    %599 = vmatpush1.bf16.msra.mxu0 %v471
    %600 = vmatprep.subr.bf16.mxu0 0
    %601 = vmatpush1.bf16.msra.mxu0 %v470
    %602 = vmatprep.subr.bf16.mxu0 0
    %603 = vmatpush1.bf16.msra.mxu0 %v469
    %604 = vmatprep.subr.bf16.mxu0 0
    %605 = vmatpush1.bf16.msra.mxu0 %v468
    %606 = vmatprep.subr.bf16.mxu0 0
    %607 = vmatpush1.bf16.msra.mxu0 %v467
    %608 = vmatprep.subr.bf16.mxu0 0
    %609 = vmatpush1.bf16.msra.mxu0 %v466
    %610 = vmatprep.subr.bf16.mxu0 0
    %611 = vmatpush2.bf16.msra.mxu0 %v481
    %612 = vmatprep.subr.bf16.mxu0 0
    %613 = vmatpush2.bf16.msra.mxu0 %v480
    %614 = vmatprep.subr.bf16.mxu0 0
    %615 = vmatpush2.bf16.msra.mxu0 %v479
    %616 = vmatprep.subr.bf16.mxu0 0
    %617 = vmatpush2.bf16.msra.mxu0 %v478
    %618 = vmatprep.subr.bf16.mxu0 0
    %619 = vmatpush2.bf16.msra.mxu0 %v477
    %620 = vmatprep.subr.bf16.mxu0 0
    %621 = vmatpush2.bf16.msra.mxu0 %v476
    %622 = vmatprep.subr.bf16.mxu0 0
    %623 = vmatpush2.bf16.msra.mxu0 %v475
    %624 = vmatprep.subr.bf16.mxu0 0
    %625 = vmatpush2.bf16.msra.mxu0 %v474
    %626 = vmatprep.mubr.bf16.mxu0 %v68
    %627 = vmatmul.mubr.bf16.gmra.mxu0 %v67
    %v628 = vpop.f32.mrf.mxu0
    %v629 = vadd.f32 %v208, %v628
    %v630 = vpop.f32.mrf.mxu0
    %v631 = vpop.f32.mrf.mxu0
    %v632 = vpop.f32.mrf.mxu0
    %633 = vdwg.mxu0
    %634 = vmatprep.subr.bf16.mxu0 0
    %635 = vmatpush1.bf16.msra.mxu0 %v489
    %636 = vmatprep.subr.bf16.mxu0 0
    %637 = vmatpush1.bf16.msra.mxu0 %v488
    %638 = vmatprep.subr.bf16.mxu0 0
    %639 = vmatpush1.bf16.msra.mxu0 %v487
    %640 = vmatprep.subr.bf16.mxu0 0
    %641 = vmatpush1.bf16.msra.mxu0 %v486
    %642 = vmatprep.subr.bf16.mxu0 0
    %643 = vmatpush1.bf16.msra.mxu0 %v485
    %644 = vmatprep.subr.bf16.mxu0 0
    %645 = vmatpush1.bf16.msra.mxu0 %v484
    %646 = vmatprep.subr.bf16.mxu0 0
    %647 = vmatpush1.bf16.msra.mxu0 %v483
    %648 = vmatprep.subr.bf16.mxu0 0
    %649 = vmatpush1.bf16.msra.mxu0 %v482
    %650 = vmatprep.subr.bf16.mxu0 0
    %651 = vmatpush2.bf16.msra.mxu0 %v497
    %652 = vmatprep.subr.bf16.mxu0 0
    %653 = vmatpush2.bf16.msra.mxu0 %v496
    %654 = vmatprep.subr.bf16.mxu0 0
    %655 = vmatpush2.bf16.msra.mxu0 %v495
    %656 = vmatprep.subr.bf16.mxu0 0
    %657 = vmatpush2.bf16.msra.mxu0 %v494
    %658 = vmatprep.subr.bf16.mxu0 0
    %659 = vmatpush2.bf16.msra.mxu0 %v493
    %660 = vmatprep.subr.bf16.mxu0 0
    %661 = vmatpush2.bf16.msra.mxu0 %v492
    %662 = vmatprep.subr.bf16.mxu0 0
    %663 = vmatpush2.bf16.msra.mxu0 %v491
    %664 = vmatprep.subr.bf16.mxu0 0
    %665 = vmatpush2.bf16.msra.mxu0 %v490
    %666 = vmatprep.mubr.bf16.mxu0 %v70
    %667 = vmatmul.mubr.bf16.gmra.mxu0 %v69
    %v668 = vpop.f32.mrf.mxu0
    %v669 = vadd.f32 %v629, %v668
    %v670 = vpop.f32.mrf.mxu0
    %v671 = vpop.f32.mrf.mxu0
    %v672 = vpop.f32.mrf.mxu0
    %673 = vdwg.mxu0
    %674 = vmatprep.subr.bf16.mxu0 0
    %675 = vmatpush1.bf16.msra.mxu0 %v505
    %676 = vmatprep.subr.bf16.mxu0 0
    %677 = vmatpush1.bf16.msra.mxu0 %v504
    %678 = vmatprep.subr.bf16.mxu0 0
    %679 = vmatpush1.bf16.msra.mxu0 %v503
    %680 = vmatprep.subr.bf16.mxu0 0
    %681 = vmatpush1.bf16.msra.mxu0 %v502
    %682 = vmatprep.subr.bf16.mxu0 0
    %683 = vmatpush1.bf16.msra.mxu0 %v501
    %684 = vmatprep.subr.bf16.mxu0 0
    %685 = vmatpush1.bf16.msra.mxu0 %v500
    %686 = vmatprep.subr.bf16.mxu0 0
    %687 = vmatpush1.bf16.msra.mxu0 %v499
    %688 = vmatprep.subr.bf16.mxu0 0
    %689 = vmatpush1.bf16.msra.mxu0 %v498
    %690 = vmatprep.subr.bf16.mxu0 0
    %691 = vmatpush2.bf16.msra.mxu0 %v513
    %692 = vmatprep.subr.bf16.mxu0 0
    %693 = vmatpush2.bf16.msra.mxu0 %v512
    %694 = vmatprep.subr.bf16.mxu0 0
    %695 = vmatpush2.bf16.msra.mxu0 %v511
    %696 = vmatprep.subr.bf16.mxu0 0
    %697 = vmatpush2.bf16.msra.mxu0 %v510
    %698 = vmatprep.subr.bf16.mxu0 0
    %699 = vmatpush2.bf16.msra.mxu0 %v509
    %700 = vmatprep.subr.bf16.mxu0 0
    %701 = vmatpush2.bf16.msra.mxu0 %v508
    %702 = vmatprep.subr.bf16.mxu0 0
    %703 = vmatpush2.bf16.msra.mxu0 %v507
    %704 = vmatprep.subr.bf16.mxu0 0
    %705 = vmatpush2.bf16.msra.mxu0 %v506
    %706 = vmatprep.mubr.bf16.mxu0 %v72
    %707 = vmatmul.mubr.bf16.gmra.mxu0 %v71
    %v708 = vpop.f32.mrf.mxu0
    %v709 = vadd.f32 %v669, %v708
    %v710 = vpop.f32.mrf.mxu0
    %v711 = vpop.f32.mrf.mxu0
    %v712 = vpop.f32.mrf.mxu0
    %713 = vdwg.mxu0
    %714 = vmatprep.subr.bf16.mxu0 0
    %715 = vmatpush1.bf16.msra.mxu0 %v521
    %716 = vmatprep.subr.bf16.mxu0 0
    %717 = vmatpush1.bf16.msra.mxu0 %v520
    %718 = vmatprep.subr.bf16.mxu0 0
    %719 = vmatpush1.bf16.msra.mxu0 %v519
    %720 = vmatprep.subr.bf16.mxu0 0
    %721 = vmatpush1.bf16.msra.mxu0 %v518
    %722 = vmatprep.subr.bf16.mxu0 0
    %723 = vmatpush1.bf16.msra.mxu0 %v517
    %724 = vmatprep.subr.bf16.mxu0 0
    %725 = vmatpush1.bf16.msra.mxu0 %v516
    %726 = vmatprep.subr.bf16.mxu0 0
    %727 = vmatpush1.bf16.msra.mxu0 %v515
    %728 = vmatprep.subr.bf16.mxu0 0
    %729 = vmatpush1.bf16.msra.mxu0 %v514
    %730 = vmatprep.subr.bf16.mxu0 0
    %731 = vmatpush2.bf16.msra.mxu0 %v529
    %732 = vmatprep.subr.bf16.mxu0 0
    %733 = vmatpush2.bf16.msra.mxu0 %v528
    %734 = vmatprep.subr.bf16.mxu0 0
    %735 = vmatpush2.bf16.msra.mxu0 %v527
    %736 = vmatprep.subr.bf16.mxu0 0
    %737 = vmatpush2.bf16.msra.mxu0 %v526
    %738 = vmatprep.subr.bf16.mxu0 0
    %739 = vmatpush2.bf16.msra.mxu0 %v525
    %740 = vmatprep.subr.bf16.mxu0 0
    %741 = vmatpush2.bf16.msra.mxu0 %v524
    %742 = vmatprep.subr.bf16.mxu0 0
    %743 = vmatpush2.bf16.msra.mxu0 %v523
    %744 = vmatprep.subr.bf16.mxu0 0
    %745 = vmatpush2.bf16.msra.mxu0 %v522
    %746 = vmatprep.mubr.bf16.mxu0 %v74
    %747 = vmatmul.mubr.bf16.gmra.mxu0 %v73
    %v748 = vpop.f32.mrf.mxu0
    %v749 = vadd.f32 %v709, %v748
    %v750 = vpop.f32.mrf.mxu0
    %v751 = vpop.f32.mrf.mxu0
    %v752 = vpop.f32.mrf.mxu0
    %753 = vdwg.mxu0
    %v754 = vmul.f32 %v749, 0.044715
    %v755 = vmul.f32 %v754, %v749
    %v756 = vadd.f32 %v755, 1.0
    %v757 = vmul.f32 %v749, %v756
    %v758 = vmul.f32 %v749, 0.5
    %v759 = vmul.f32 %v757, 0.7978846
    %v760 = vtanh.pop %v759
    %v761 = vadd.f32 %v760, 1.0
    %v762 = vmul.f32 %v758, %v761
    %763 = vst [vmem:[#allocation5] sm:$0xff] %v762
    // Predicated region
    $region18: #{tpu_custom_call.1} parent=1 // pred_check
      _
    $region19: #{tpu_custom_call.1} parent=1 // pred_check_branch
      %765 = sbr.rel (0) target = $region21
    $region20: #{tpu_custom_call.1} parent=1 // pred_region
      %s767 = ssub.s32 128, 128
      %768 = vsyncadd [#allocation4], %s767
      %s770 = sshll.u32 [#allocation5], 4
      %s771 = int_to_ptr.vmem [resolvable:$true] %s770
      %773 = dma.vmem_to_hbm [thread:$0]  %s771, 128, %s3, [#allocation4]
    $region21: #{tpu_custom_call.1} parent=1 // pred_fallthru
      _
    // Predicated region
    $region22: #{tpu_custom_call.1} parent=1 // pred_check
      _
    $region23: #{tpu_custom_call.1} parent=1 // pred_check_branch
      %775 = sbr.rel (0) target = $region25
    $region24: #{tpu_custom_call.1} parent=1 // pred_region
      %776 = dma.done [#allocation4], 128
    $region25: #{tpu_custom_call.1} parent=1 // pred_fallthru
      _
    %777 = vsyncpa [#allocation3], 1
    %778 = vsyncpa [#allocation4], 1

</llo_original>
